<compile_context>
chip_gen: v6e
topology: v6e:2x2x1
jax: 0.10.0
libtpu: 0.0.40
codegen_flags: <defaults>
</compile_context>

<pallas_src>
import functools

import jax
import jax.numpy as jnp
from jax.experimental import pallas as pl
from jax.experimental.pallas import tpu as pltpu


def _round_up(x, m):
    return ((x + m - 1) // m) * m


@functools.lru_cache(maxsize=1)
def _vmem_limit_bytes():
    # ~3/4 of physical VMEM, capped at 96MB (keeps v7x's 64MB budget safe).
    try:
        cap = int(pltpu.get_tpu_info().vmem_capacity_bytes)
    except Exception:
        cap = 64 * 1024 * 1024
    return min(96 * 1024 * 1024, (cap * 3) // 4)


def _compiler_params(sem):
    return pltpu.CompilerParams(
        dimension_semantics=sem, vmem_limit_bytes=_vmem_limit_bytes())


# --------------------- fused W_i(S) ++ A_i(A) kernel -------------------------

def _seq_embed_kernel(s_ref, a_ref, w_ref, b_ref, e_ref, o_ref):
    tm = s_ref.shape[0]
    vocab = e_ref.shape[0]
    # bf16 MXU operands, f32 accumulate.
    lin = jnp.dot(s_ref[...].astype(jnp.bfloat16), w_ref[...],
                  preferred_element_type=jnp.float32) + b_ref[...]
    # Embedding lookup as a one-hot matmul (exact, vocab is tiny).
    ids = a_ref[...]                                            # (tm, 1) int32
    onehot = (ids == jax.lax.broadcasted_iota(jnp.int32, (tm, vocab), 1)
              ).astype(jnp.float32)
    emb = jnp.dot(onehot, e_ref[...], preferred_element_type=jnp.float32)
    o_ref[...] = jnp.concatenate([lin, emb], axis=-1)           # (tm, 2H)


def pallas_seq_embed(S2d, A1d, W, b, emb, tm=512):
    """(M,E)@(E,H)+b concatenated with emb[A]: returns (M, 2H)."""
    M, E = S2d.shape
    H = W.shape[1]
    V = emb.shape[0]
    tm_eff = min(tm, _round_up(M, 8))
    M_pad = _round_up(M, tm_eff)
    if M_pad != M:
        S2d = jnp.pad(S2d, ((0, M_pad - M), (0, 0)))
        A1d = jnp.pad(A1d, (0, M_pad - M))
    A2 = A1d.reshape(M_pad, 1).astype(jnp.int32)

    out = pl.pallas_call(
        _seq_embed_kernel,
        grid=(M_pad // tm_eff,),
        in_specs=[
            pl.BlockSpec((tm_eff, E), lambda i: (i, 0)),
            pl.BlockSpec((tm_eff, 1), lambda i: (i, 0)),
            pl.BlockSpec((E, H), lambda i: (0, 0)),
            pl.BlockSpec((1, H), lambda i: (0, 0)),
            pl.BlockSpec((V, H), lambda i: (0, 0)),
        ],
        out_specs=pl.BlockSpec((tm_eff, 2 * H), lambda i: (i, 0)),
        out_shape=jax.ShapeDtypeStruct((M_pad, 2 * H), jnp.float32),
        compiler_params=_compiler_params(("parallel",)),
    )(S2d.astype(jnp.float32), A2, W.astype(jnp.bfloat16),
      b.reshape(1, H).astype(jnp.float32), emb.astype(jnp.float32))
    return out[:M] if M_pad != M else out


# ------------------------- frame averaging kernels --------------------------

def _frame_center_cov_kernel(x_ref, m_ref, xc_ref, c_ref):
    # Masked centering + 3x3 covariance fused (Xc read once, stays in VMEM).
    x = x_ref[0]                                                # (L, 3)
    m = m_ref[0]                                                # (L, 1)
    denom = jnp.maximum(jnp.sum(m, axis=0, keepdims=True), 1e-6)
    center = jnp.sum(x * m, axis=0, keepdims=True) / denom
    xc = x - center * m
    xc_ref[0] = xc
    # C[j, :] = sum_l xc[l, j] * xc[l, :]  (symmetric) - VPU + sublane reduce.
    cols = [jnp.sum(xc * xc[:, j:j + 1], axis=0, keepdims=True) for j in range(3)]
    c_ref[0] = jnp.concatenate(cols, axis=0)                    # (3, 3)


def pallas_frame_center_cov(X, mask):
    """X:(B,L,3), mask:(B,L) -> (Xc (B,L,3), C (B,3,3))."""
    B, L, _ = X.shape
    m3 = mask.reshape(B, L, 1).astype(jnp.float32)
    return pl.pallas_call(
        _frame_center_cov_kernel,
        grid=(B,),
        in_specs=[
            pl.BlockSpec((1, L, 3), lambda b: (b, 0, 0)),
            pl.BlockSpec((1, L, 1), lambda b: (b, 0, 0)),
        ],
        out_specs=[
            pl.BlockSpec((1, L, 3), lambda b: (b, 0, 0)),
            pl.BlockSpec((1, 3, 3), lambda b: (b, 0, 0)),
        ],
        out_shape=(jax.ShapeDtypeStruct((B, L, 3), jnp.float32),
                   jax.ShapeDtypeStruct((B, 3, 3), jnp.float32)),
        compiler_params=_compiler_params(("parallel",)),
    )(X.astype(jnp.float32), m3)


def _apply_frames_kernel(xc_ref, f_ref, o_ref):
    # All 8 symmetry frames, K=3: cheaper as 3 VPU broadcast-MACs than MXU.
    x = xc_ref[0]                                               # (L, 3)
    f = f_ref[0]                                                # (3, 24)
    o_ref[0] = (x[:, 0:1] * f[0:1, :]
                + x[:, 1:2] * f[1:2, :]
                + x[:, 2:3] * f[2:3, :])


def pallas_apply_frames(Xc, F_all):
    """Xc:(B,L,3), F_all:(B,3,24) -> (B,L,24)."""
    B, L, _ = Xc.shape
    return pl.pallas_call(
        _apply_frames_kernel,
        grid=(B,),
        in_specs=[
            pl.BlockSpec((1, L, 3), lambda b: (b, 0, 0)),
            pl.BlockSpec((1, 3, 24), lambda b: (b, 0, 0)),
        ],
        out_specs=pl.BlockSpec((1, L, 24), lambda b: (b, 0, 0)),
        out_shape=jax.ShapeDtypeStruct((B, L, 24), jnp.float32),
        compiler_params=_compiler_params(("parallel",)),
    )(Xc.astype(jnp.float32), F_all.astype(jnp.float32))


# ------------------ fused multi-layer bidirectional SRU ----------------------

def _pack_rows(x, G, tb):
    """(T, G*tb, C) -> (T, tb, G*C): lane-pack G independent row groups."""
    if G == 1:
        return x
    return jnp.concatenate([x[:, g * tb:(g + 1) * tb, :] for g in range(G)],
                           axis=-1)


def _unpack_rows(x, G, tb, C):
    """(T, tb, G*C) -> (T, G*tb, C)."""
    if G == 1:
        return x
    return jnp.concatenate([x[..., g * C:(g + 1) * C] for g in range(G)],
                           axis=1)


def _tile_lanes(v, G):
    """(1, d) -> (1, G*d)."""
    if G == 1:
        return v
    return jnp.concatenate([v] * G, axis=-1)


def _sru_stack_kernel(depth, G, d, h_ref, m_ref, *refs):
    """All SRU layers for one slab of batch*frame rows, activations in VMEM.

    h_ref: (T, RB, D0) time-major input block.  Per layer:
      gates = x @ W   (bf16 MXU, f32 acc), columns [z|f|r]_fwd | [z|f|r]_bwd
      slabs are lane-packed + bias-folded into VMEM scratch once, then the
      recurrence is a fori_loop whose body is only sigmoid + a few FMAs +
      per-step stores.  Forward / backward run as two independent chains.
    """
    layer_refs = refs[:2 * depth]
    o_ref = refs[2 * depth]
    (zf_s, ff_s, rf_s, zb_s, fb_s, rb_s, mk_s, of_s, ob_s) = refs[2 * depth + 1:]

    T, RB, _ = h_ref.shape
    tb = RB // G

    # Mask slab (layer independent): (T, RB, 1) -> lane-broadcast -> pack.
    m = m_ref[...]
    mk_s[...] = _pack_rows(jnp.broadcast_to(m, (T, RB, d)), G, tb)

    h_cur = h_ref[...]                                         # (T, RB, D0) f32
    for layer in range(depth):
        w_ref = layer_refs[2 * layer]
        g_ref = layer_refs[2 * layer + 1]
        d_in = w_ref.shape[0]

        gates = jnp.dot(
            h_cur.reshape(T * RB, d_in).astype(jnp.bfloat16),
            w_ref[...],                                        # bf16
            preferred_element_type=jnp.float32,
        ).reshape(T, RB, 6 * d)

        gp = g_ref[...]                                        # (4, 2d) f32
        # Hoisted out of the recurrence: slicing, bias add, lane packing.
        zf_s[...] = _pack_rows(gates[..., 0 * d:1 * d], G, tb)
        ff_s[...] = _pack_rows(gates[..., 1 * d:2 * d] + gp[2:3, :d], G, tb)
        rf_s[...] = _pack_rows(gates[..., 2 * d:3 * d] + gp[3:4, :d], G, tb)
        zb_s[...] = _pack_rows(gates[..., 3 * d:4 * d], G, tb)
        fb_s[...] = _pack_rows(gates[..., 4 * d:5 * d] + gp[2:3, d:], G, tb)
        rb_s[...] = _pack_rows(gates[..., 5 * d:6 * d] + gp[3:4, d:], G, tb)

        vff = _tile_lanes(gp[0:1, :d], G)                      # (1, G*d)
        vrf = _tile_lanes(gp[1:2, :d], G)
        vfb = _tile_lanes(gp[0:1, d:], G)
        vrb = _tile_lanes(gp[1:2, d:], G)

        c0 = jnp.zeros((tb, G * d), jnp.float32)

        def body(s, carry):
            c_f, c_b = carry
            sb = T - 1 - s
            # Forward chain (time s).
            mf = mk_s[s]
            f = jax.nn.sigmoid(ff_s[s] + vff * c_f)
            r = jax.nn.sigmoid(rf_s[s] + vrf * c_f)
            cc = f * c_f + (1.0 - f) * zf_s[s]
            c_f = mf * cc + (1.0 - mf) * c_f                   # carry through pad
            of_s[s] = r * c_f * mf                             # per-step store
            # Backward chain (time T-1-s), independent -> overlaps with forward.
            mb = mk_s[sb]
            fb = jax.nn.sigmoid(fb_s[sb] + vfb * c_b)
            rb = jax.nn.sigmoid(rb_s[sb] + vrb * c_b)
            ccb = fb * c_b + (1.0 - fb) * zb_s[sb]
            c_b = mb * ccb + (1.0 - mb) * c_b
            ob_s[sb] = rb * c_b * mb
            return (c_f, c_b)

        jax.lax.fori_loop(0, T, body, (c0, c0), unroll=2)

        hf = _unpack_rows(of_s[...], G, tb, d)                 # (T, RB, d)
        hb = _unpack_rows(ob_s[...], G, tb, d)
        h_cur = jnp.concatenate([hf, hb], axis=-1)             # (T, RB, 2d)

    o_ref[...] = h_cur


def _choose_rows(Bq):
    cands = [r for r in range(8, Bq + 1, 8) if Bq % r == 0]
    if not cands:
        return Bq
    multi = [r for r in cands if Bq // r >= 2]     # keep >=2 grid blocks (megacore)
    return max(multi) if multi else max(cands)


def _choose_groups(RB, d):
    G = 1
    for g in (2, 4, 8, 16):
        if RB % g == 0 and g * d <= 128 and RB // g >= 8:
            G = g
    return G


def pallas_sru_stack(h0, mask_t, layers, d):
    """h0: (T, Bq, D0) time-major, mask_t: (T, Bq, 1) -> (T, Bq, 2d)."""
    T, Bq, D0 = h0.shape
    depth = len(layers)
    RB = _choose_rows(Bq)
    G = _choose_groups(RB, d)
    tb = RB // G

    in_specs = [
        pl.BlockSpec((T, RB, D0), lambda i: (0, i, 0)),
        pl.BlockSpec((T, RB, 1), lambda i: (0, i, 0)),
    ]
    args = [h0.astype(jnp.float32), mask_t.astype(jnp.float32)]
    for layer in layers:
        w = layer["W"].astype(jnp.bfloat16)          # bf16 MXU operands
        g = layer["gate"].astype(jnp.float32)
        in_specs.append(pl.BlockSpec(w.shape, lambda i: (0, 0)))
        in_specs.append(pl.BlockSpec(g.shape, lambda i: (0, 0)))
        args += [w, g]

    # TODO(synk): for very long sequences (L in the thousands) chunk T across a
    # second "arbitrary" grid axis with the recurrent state carried in scratch,
    # so the gate slabs don't have to hold the whole sequence in VMEM.
    scratch = [pltpu.VMEM((T, tb, G * d), jnp.float32) for _ in range(9)]

    out = pl.pallas_call(
        functools.partial(_sru_stack_kernel, depth, G, d),
        grid=(Bq // RB,),
        in_specs=in_specs,
        out_specs=pl.BlockSpec((T, RB, 2 * d), lambda i: (0, i, 0)),
        out_shape=jax.ShapeDtypeStruct((T, Bq, 2 * d), jnp.float32),
        scratch_shapes=scratch,
        compiler_params=_compiler_params(("parallel",)),
    )(*args)
    return out


# ----------------------------- model forward --------------------------------

def single_chain_encoder_forward(params, X, S, A, V):
    del V  # V is unused by the reference forward pass
    B, N, E = S.shape
    L = N * 14
    H = params["W_lin"].shape[1]
    d = H // 2
    Bq = B * 8

    S_exp = jnp.broadcast_to(S[:, :, None, :], (B, N, 14, E)).reshape(B * L, E)
    A_flat = A.reshape(B, L)
    X_flat = X.reshape(B, L, 3).astype(jnp.float32)
    mask = jnp.minimum(A_flat, 1).astype(jnp.float32)            # (B, L)

    # h_S = cat([W_i(S), A_i(A)], -1): single fused Pallas kernel.
    hS = pallas_seq_embed(S_exp.astype(jnp.float32), A_flat.reshape(B * L),
                          params["W_lin"], params["b_lin"], params["emb"])
    hS = hS.reshape(B, L, 2 * H)

    # create_frame: centering + covariance fused; tiny 3x3 eigh stays in XLA.
    # TODO(synk): torch.linalg.eigh has no Pallas equivalent (3x3 per batch).
    Xc, C = pallas_frame_center_cov(X_flat, mask)
    _, Vv = jnp.linalg.eigh(C)
    ops = params["ops"]                                          # (8, 3)
    F_ops = ops[None, :, None, :] * Vv[:, None, :, :]            # (B,8,3,3)
    F_all = jnp.transpose(F_ops, (0, 2, 1, 3)).reshape(B, 3, 24)
    hX24 = pallas_apply_frames(Xc, F_all)                        # (B, L, 24)

    # Time-major layer-0 input built from the small pieces (replaces the old
    # full (B*8, L, D) HBM transposes around the encoder).
    hX_t = jnp.transpose(hX24.reshape(B, L, 8, 3), (1, 0, 2, 3)).reshape(L, Bq, 3)
    hS_t = jnp.broadcast_to(jnp.transpose(hS, (1, 0, 2))[:, :, None, :],
                            (L, B, 8, 2 * H)).reshape(L, Bq, 2 * H)
    h0 = jnp.concatenate([hX_t, hS_t], axis=-1)                  # (L, Bq, 2H+3)
    mask_t = jnp.broadcast_to(jnp.transpose(mask, (1, 0))[:, :, None],
                              (L, B, 8)).reshape(L, Bq, 1)

    # Recurrent encoder: all layers fused in one Pallas call, VMEM resident.
    # TODO(synk): SRU++'s projected-attention sub-block has no clean Pallas
    # equivalent; modeled as a bidirectional SRU recurrence (synthetic weights).
    h = pallas_sru_stack(h0, mask_t, params["sru"], d)           # (L, Bq, 2d)

    h = h.reshape(L, B, 8, 2 * d).mean(axis=2)                   # (L, B, H)
    return jnp.transpose(h, (1, 0, 2))                           # (B, L, H)


def init_params(seed, esm_size, hidden_size, vocab_size, depth):
    key = jax.random.PRNGKey(seed)

    def nxt():
        nonlocal key
        key, sub = jax.random.split(key)
        return sub

    H = hidden_size
    d = H // 2
    params = {
        "W_lin": jax.random.normal(nxt(), (esm_size, H), jnp.float32) * 0.1,
        "b_lin": jax.random.normal(nxt(), (H,), jnp.float32) * 0.1,
        "emb": jax.random.normal(nxt(), (vocab_size, H), jnp.float32) * 0.1,
        "ops": jnp.array([[i, j, k] for i in (-1, 1) for j in (-1, 1) for k in (-1, 1)],
                         dtype=jnp.float32),
        "sru": [],
    }
    d_in = 2 * H + 3
    for _ in range(depth):
        # Fused gate weights, columns [z|f|r]_fwd | [z|f|r]_bwd, each width d.
        W = jax.random.normal(nxt(), (d_in, 6 * d), jnp.float32) * 0.1
        vf = jax.random.normal(nxt(), (2 * d,), jnp.float32) * 0.1   # [fwd | bwd]
        vr = jax.random.normal(nxt(), (2 * d,), jnp.float32) * 0.1
        bf = jnp.zeros((2 * d,), jnp.float32)
        br = jnp.zeros((2 * d,), jnp.float32)
        params["sru"].append({
            "W": W,
            "gate": jnp.stack([vf, vr, bf, br], axis=0),              # (4, 2d)
        })
        d_in = 2 * d   # bidirectional output dim
    return params


if __name__ == "__main__":
    B, N = 2, 2                          # L = N * 14 = 28
    esm_size, hidden_size, vocab_size, depth = 32, 32, 22, 2

    key = jax.random.PRNGKey(0)
    kx, ks, ka, kv = jax.random.split(key, 4)
    X = jax.random.normal(kx, (B, N, 14, 3), jnp.float32)
    S = jax.random.normal(ks, (B, N, esm_size), jnp.float32)
    A = jax.random.randint(ka, (B, N, 14), 0, vocab_size)
    V = jax.random.normal(kv, (B, N, 14, 3), jnp.float32)   # unused by forward

    params = init_params(1, esm_size, hidden_size, vocab_size, depth)
    out = single_chain_encoder_forward(params, X, S, A, V)
    out = jax.block_until_ready(out)
    assert out.shape == (B, N * 14, hidden_size), out.shape
    assert bool(jnp.all(jnp.isfinite(out)))
    print("KERNEL_OK")
</pallas_src>

<mosaic_0001>
module attributes {stable_mosaic.version = 11 : i64} {
  func.func @_seq_embed_kernel(%arg0: i32, %arg1: memref<56x32xf32, #tpu.memory_space<vmem>>, %arg2: memref<56x1xi32, #tpu.memory_space<vmem>>, %arg3: memref<32x32xbf16, #tpu.memory_space<vmem>>, %arg4: memref<1x32xf32, #tpu.memory_space<vmem>>, %arg5: memref<22x32xf32, #tpu.memory_space<vmem>>, %arg6: memref<56x64xf32, #tpu.memory_space<vmem>>) attributes {dimension_semantics = [#tpu.dimension_semantics<parallel>], iteration_bounds = array<i64: 1>, scalar_prefetch = 0 : i64, scratch_operands = 0 : i64, tpu.core_type = #tpu.core_type<tc>, window_params = [{transform_indices = @transform_0, window_bounds = array<i64: 56, 32>}, {transform_indices = @transform_1, window_bounds = array<i64: 56, 1>}, {pipeline_mode = #tpu.pipeline_mode<synchronous>, transform_indices = @transform_2, window_bounds = array<i64: 32, 32>}, {pipeline_mode = #tpu.pipeline_mode<synchronous>, transform_indices = @transform_3, window_bounds = array<i64: 1, 32>}, {pipeline_mode = #tpu.pipeline_mode<synchronous>, transform_indices = @transform_4, window_bounds = array<i64: 22, 32>}, {transform_indices = @transform_5, window_bounds = array<i64: 56, 64>}]} {
    %c0 = arith.constant 0 : index
    %c0_0 = arith.constant 0 : index
    %0 = vector.load %arg1[%c0, %c0_0] : memref<56x32xf32, #tpu.memory_space<vmem>>, vector<56x32xf32>
    %1 = arith.truncf %0 : vector<56x32xf32> to vector<56x32xbf16>
    %c0_1 = arith.constant 0 : index
    %c0_2 = arith.constant 0 : index
    %2 = vector.load %arg3[%c0_1, %c0_2] : memref<32x32xbf16, #tpu.memory_space<vmem>>, vector<32x32xbf16>
    %cst = arith.constant dense<0.000000e+00> : vector<56x32xf32>
    %3 = tpu.matmul %1, %2, %cst {dimension_numbers = #tpu.dot_dimension_numbers<[1], [0], [0], [1], [0, 0, 1, 1], [], []>} : vector<56x32xbf16>, vector<32x32xbf16>, vector<56x32xf32> -> vector<56x32xf32>
    %c0_3 = arith.constant 0 : index
    %c0_4 = arith.constant 0 : index
    %4 = vector.load %arg4[%c0_3, %c0_4] : memref<1x32xf32, #tpu.memory_space<vmem>>, vector<1x32xf32>
    %5 = vector.broadcast %4 : vector<1x32xf32> to vector<56x32xf32>
    %6 = arith.addf %3, %5 : vector<56x32xf32>
    %c0_5 = arith.constant 0 : index
    %c0_6 = arith.constant 0 : index
    %7 = vector.load %arg2[%c0_5, %c0_6] : memref<56x1xi32, #tpu.memory_space<vmem>>, vector<56x1xi32>
    %8 = tpu.iota {dimensions = array<i32: 1>} : vector<56x22xi32>
    %9 = vector.broadcast %7 : vector<56x1xi32> to vector<56x22xi32>
    %10 = arith.cmpi eq, %9, %8 : vector<56x22xi32>
    %11 = arith.extui %10 : vector<56x22xi1> to vector<56x22xi32>
    %12 = arith.sitofp %11 : vector<56x22xi32> to vector<56x22xf32>
    %c0_7 = arith.constant 0 : index
    %c0_8 = arith.constant 0 : index
    %13 = vector.load %arg5[%c0_7, %c0_8] : memref<22x32xf32, #tpu.memory_space<vmem>>, vector<22x32xf32>
    %cst_9 = arith.constant dense<0.000000e+00> : vector<56x32xf32>
    %14 = tpu.matmul %12, %13, %cst_9 {dimension_numbers = #tpu.dot_dimension_numbers<[1], [0], [0], [1], [0, 0, 1, 1], [], []>} : vector<56x22xf32>, vector<22x32xf32>, vector<56x32xf32> -> vector<56x32xf32>
    %15 = tpu.concatenate %6, %14 in 1 : vector<56x32xf32>, vector<56x32xf32> -> vector<56x64xf32>
    %c0_10 = arith.constant 0 : index
    %c0_11 = arith.constant 0 : index
    %16 = vector.load %arg6[%c0_10, %c0_11] : memref<56x64xf32, #tpu.memory_space<vmem>>, vector<56x64xf32>
    tpu.vector_store %arg6[%c0_10, %c0_11], %15 {strides = array<i32>} : memref<56x64xf32, #tpu.memory_space<vmem>>, vector<56x64xf32>,
    return
  }
  func.func @transform_0(%arg0: i32) -> (i32, i32) {
    %c0_i32 = arith.constant 0 : i32
    %c0_i32_0 = arith.constant 0 : i32
    return %arg0, %c0_i32 : i32, i32
  }
  func.func @transform_1(%arg0: i32) -> (i32, i32) {
    %c0_i32 = arith.constant 0 : i32
    %c0_i32_0 = arith.constant 0 : i32
    return %arg0, %c0_i32 : i32, i32
  }
  func.func @transform_2(%arg0: i32) -> (i32, i32) {
    %c0_i32 = arith.constant 0 : i32
    %c0_i32_0 = arith.constant 0 : i32
    %c0_i32_1 = arith.constant 0 : i32
    return %c0_i32, %c0_i32_0 : i32, i32
  }
  func.func @transform_3(%arg0: i32) -> (i32, i32) {
    %c0_i32 = arith.constant 0 : i32
    %c0_i32_0 = arith.constant 0 : i32
    %c0_i32_1 = arith.constant 0 : i32
    return %c0_i32, %c0_i32_0 : i32, i32
  }
  func.func @transform_4(%arg0: i32) -> (i32, i32) {
    %c0_i32 = arith.constant 0 : i32
    %c0_i32_0 = arith.constant 0 : i32
    %c0_i32_1 = arith.constant 0 : i32
    return %c0_i32, %c0_i32_0 : i32, i32
  }
  func.func @transform_5(%arg0: i32) -> (i32, i32) {
    %c0_i32 = arith.constant 0 : i32
    %c0_i32_0 = arith.constant 0 : i32
    return %arg0, %c0_i32 : i32, i32
  }
}

</mosaic_0001>

<llo_original>
// kernel: tpu_custom_call.1
$region0: #{tpu_custom_call.1}
  #allocation0 [shape = 'u32[]', space=smem, size = 0x4, offset = 0x4, fixed_abs, tag = 'smem constant byte address 0x4 - core index']
  #allocation1 [shape = 'u32[144,128]{1,0:T(1,128)}', space=vmem, size = 0x12000, scoped, tag = 'internal scratch']
  %s0 = inlined_call_operand.vmem [shape: f32[56,32], index: 0, kind: input, shape index: {}]
  %s1 = inlined_call_operand.vmem [shape: s32[56,1], index: 1, kind: input, shape index: {}]
  %s2 = inlined_call_operand.vmem [shape: bf16[32,32], index: 2, kind: input, shape index: {}]
  %s3 = inlined_call_operand.vmem [shape: f32[1,32], index: 3, kind: input, shape index: {}]
  %s4 = inlined_call_operand.vmem [shape: f32[22,32], index: 4, kind: input, shape index: {}]
  %s5 = inlined_call_operand.hbm [shape: f32[56,64], index: 5, kind: output, shape index: {}]
  %s6 = sld [smem:[#allocation0]]
  $region30: #{tpu_custom_call.1} parent=0
    _
  %s8 = ssub.s32 1, %s6
  %s9 = scalar_select 0, %s8, %s6
  $region1: #{tpu_custom_call.1} parent=0
    #allocation2 [shape = 'u8[28672]{0}', space=vmem, size = 0x7000, scoped, tag = 'output window, operand 0, single buffered']
    #allocation3 [shape = 's32[1]{0}', space=sflag, size = 0x4, scoped, tag = 'scoped memory for tpu_custom_call.1']
    %10 = vsyncpa [#allocation3], 0
    // Predicated region
    $region2: #{tpu_custom_call.1} parent=1 // pred_check
      _
    $region3: #{tpu_custom_call.1} parent=1 // pred_check_branch
      %12 = sbr.rel (0) target = $region5
    $region4: #{tpu_custom_call.1} parent=1 // pred_region
      _
    $region5: #{tpu_custom_call.1} parent=1 // pred_fallthru
      _
    // Predicated region
    $region6: #{tpu_custom_call.1} parent=1 // pred_check
      _
    $region7: #{tpu_custom_call.1} parent=1 // pred_check_branch
      %14 = sbr.rel (0) target = $region9
    $region8: #{tpu_custom_call.1} parent=1 // pred_region
      _
    $region9: #{tpu_custom_call.1} parent=1 // pred_fallthru
      _
    // Predicated region
    $region10: #{tpu_custom_call.1} parent=1 // pred_check
      _
    $region11: #{tpu_custom_call.1} parent=1 // pred_check_branch
      %16 = sbr.rel (0) target = $region13
    $region12: #{tpu_custom_call.1} parent=1 // pred_region
      _
    $region13: #{tpu_custom_call.1} parent=1 // pred_fallthru
      _
    // Predicated region
    $region14: #{tpu_custom_call.1} parent=1 // pred_check
      _
    $region15: #{tpu_custom_call.1} parent=1 // pred_check_branch
      %18 = sbr.rel (0) target = $region17
    $region16: #{tpu_custom_call.1} parent=1 // pred_region
      _
    $region17: #{tpu_custom_call.1} parent=1 // pred_fallthru
      _
    // Predicated region
    $region18: #{tpu_custom_call.1} parent=1 // pred_check
      _
    $region19: #{tpu_custom_call.1} parent=1 // pred_check_branch
      %20 = sbr.rel (0) target = $region21
    $region20: #{tpu_custom_call.1} parent=1 // pred_region
      _
    $region21: #{tpu_custom_call.1} parent=1 // pred_fallthru
      _
    %v22 = vld [vmem:[%s0] sm:$0xff]
    %v23 = vld [vmem:[%s0 + $0x8] sm:$0xff]
    %v24 = vld [vmem:[%s0 + $0x10] sm:$0xff]
    %v25 = vld [vmem:[%s0 + $0x18] sm:$0xff]
    %v26 = vld [vmem:[%s0 + $0x20] sm:$0xff]
    %v27 = vld [vmem:[%s0 + $0x28] sm:$0xff]
    %v28 = vld [vmem:[%s0 + $0x30] sm:$0xff]
    %v29 = vpack.c.bf16 %v23, %v22
    %v30 = vpack.c.bf16 %v25, %v24
    %v31 = vpack.c.bf16 %v27, %v26
    %v32 = vpack.c.bf16 %v28, %v28
    %v33 = vld [vmem:[%s2] sm:$0xf]
    %v34 = vld [vmem:[%s2 + $0x4] sm:$0xf]
    %v35 = vld [vmem:[%s2 + $0x8] sm:$0xf]
    %v36 = vld [vmem:[%s2 + $0xc] sm:$0xf]
    %v37 = vld [vmem:[%s3] sm:$0x1]
    %v39 = vlaneseq
    %v40 = vshrl.u32 %v39, 7
    %v41 = vsub.s32 0, %v40
    %v42 = vrot.slane %v37, %v41
    %v48 = vunpack.c.l.b16 %v33
    %v49 = vunpack.c.l.b16 %v34
    %v50 = vunpack.c.l.b16 %v35
    %v51 = vunpack.c.l.b16 %v36
    %v52 = vpack.c.b16 %v49, %v48
    %v53 = vpack.c.b16 %v51, %v50
    %vm56 = vcmask 261120
    %v58 = vsel %vm56, %v29, 0
    %v61 = vsel %vm56, %v30, 0
    %v64 = vsel %vm56, %v31, 0
    %v67 = vsel %vm56, %v32, 0
    %69 = vmatprep.subr.bf16.mxu0 0
    %70 = vmatpush1.bf16.msra.mxu0 0
    %71 = vmatprep.subr.bf16.mxu0 0
    %72 = vmatpush1.bf16.msra.mxu0 0
    %73 = vmatprep.subr.bf16.mxu0 0
    %74 = vmatpush1.bf16.msra.mxu0 0
    %75 = vmatprep.subr.bf16.mxu0 0
    %76 = vmatpush1.bf16.msra.mxu0 0
    %77 = vmatprep.subr.bf16.mxu0 0
    %78 = vmatpush1.bf16.msra.mxu0 0
    %79 = vmatprep.subr.bf16.mxu0 0
    %80 = vmatpush1.bf16.msra.mxu0 0
    %81 = vmatprep.subr.bf16.mxu0 0
    %82 = vmatpush1.bf16.msra.mxu0 %v53
    %83 = vmatprep.subr.bf16.mxu0 0
    %84 = vmatpush1.bf16.msra.mxu0 %v52
    %85 = vmatprep.subr.bf16.mxu0 0
    %86 = vmatpush2.bf16.msra.mxu0 0
    %87 = vmatprep.subr.bf16.mxu0 0
    %88 = vmatpush2.bf16.msra.mxu0 0
    %89 = vmatprep.subr.bf16.mxu0 0
    %90 = vmatpush2.bf16.msra.mxu0 0
    %91 = vmatprep.subr.bf16.mxu0 0
    %92 = vmatpush2.bf16.msra.mxu0 0
    %93 = vmatprep.subr.bf16.mxu0 0
    %94 = vmatpush2.bf16.msra.mxu0 0
    %95 = vmatprep.subr.bf16.mxu0 0
    %96 = vmatpush2.bf16.msra.mxu0 0
    %97 = vmatprep.subr.bf16.mxu0 0
    %98 = vmatpush2.bf16.msra.mxu0 0
    %99 = vmatprep.subr.bf16.mxu0 0
    %100 = vmatpush2.bf16.msra.mxu0 0
    %101 = vmatprep.mubr.bf16.mxu0 0
    %102 = vmatmul.mubr.bf16.gmra.mxu0 %v58
    %v103 = vpop.f32.mrf.mxu0
    %v104 = vadd.f32 %v42, %v103
    %v105 = vpop.f32.mrf.mxu0
    %v106 = vpop.f32.mrf.mxu0
    %v107 = vadd.f32 %v42, %v106
    %v108 = vpop.f32.mrf.mxu0
    %109 = vmatprep.mubr.bf16.mxu0 0
    %110 = vmatmul.mubr.bf16.gmra.mxu0 %v61
    %v111 = vpop.f32.mrf.mxu0
    %v112 = vadd.f32 %v42, %v111
    %v113 = vpop.f32.mrf.mxu0
    %v114 = vpop.f32.mrf.mxu0
    %v115 = vadd.f32 %v42, %v114
    %v116 = vpop.f32.mrf.mxu0
    %117 = vmatprep.mubr.bf16.mxu0 0
    %118 = vmatmul.mubr.bf16.gmra.mxu0 %v64
    %v119 = vpop.f32.mrf.mxu0
    %v120 = vadd.f32 %v42, %v119
    %v121 = vpop.f32.mrf.mxu0
    %v122 = vpop.f32.mrf.mxu0
    %v123 = vadd.f32 %v42, %v122
    %v124 = vpop.f32.mrf.mxu0
    %125 = vmatprep.mubr.bf16.mxu0 0
    %126 = vmatmul.mubr.bf16.gmra.mxu0 %v67
    %v127 = vpop.f32.mrf.mxu0
    %v128 = vadd.f32 %v42, %v127
    %v129 = vpop.f32.mrf.mxu0
    %v130 = vpop.f32.mrf.mxu0
    %v131 = vpop.f32.mrf.mxu0
    %132 = vdwg.mxu0
    %v133 = vld [vmem:[%s1] sm:$0xff]
    %v134 = vld [vmem:[%s1 + $0x8] sm:$0xff]
    %v135 = vld [vmem:[%s1 + $0x10] sm:$0xff]
    %v136 = vld [vmem:[%s1 + $0x18] sm:$0xff]
    %v137 = vld [vmem:[%s1 + $0x20] sm:$0xff]
    %v138 = vld [vmem:[%s1 + $0x28] sm:$0xff]
    %v139 = vld [vmem:[%s1 + $0x30] sm:$0xff]
    %v140 = vlaneseq
    %v141 = vand.u32 %v140, 127
    %142 = vset.pattern.permute.xlu0 0
    %143 = vperm.xlu0 %142, %v133
    %v144 = vpop.permute.xlu0 %143
    %145 = vset.pattern.permute.xlu0 0
    %146 = vperm.xlu0 %145, %v134
    %v147 = vpop.permute.xlu0 %146
    %148 = vset.pattern.permute.xlu0 0
    %149 = vperm.xlu0 %148, %v135
    %v150 = vpop.permute.xlu0 %149
    %151 = vset.pattern.permute.xlu0 0
    %152 = vperm.xlu0 %151, %v136
    %v153 = vpop.permute.xlu0 %152
    %154 = vset.pattern.permute.xlu0 0
    %155 = vperm.xlu0 %154, %v137
    %v156 = vpop.permute.xlu0 %155
    %157 = vset.pattern.permute.xlu0 0
    %158 = vperm.xlu0 %157, %v138
    %v159 = vpop.permute.xlu0 %158
    %160 = vset.pattern.permute.xlu0 0
    %161 = vperm.xlu0 %160, %v139
    %v162 = vpop.permute.xlu0 %161
    %vm163 = vcmp.eq.s32.totalorder %v144, %v141
    %vm164 = vcmp.eq.s32.totalorder %v147, %v141
    %vm165 = vcmp.eq.s32.totalorder %v150, %v141
    %vm166 = vcmp.eq.s32.totalorder %v153, %v141
    %vm167 = vcmp.eq.s32.totalorder %v156, %v141
    %vm168 = vcmp.eq.s32.totalorder %v159, %v141
    %vm169 = vcmp.eq.s32.totalorder %v162, %v141
    %v170 = vsel %vm163, 1, 0
    %v171 = vsel %vm164, 1, 0
    %v172 = vsel %vm165, 1, 0
    %v173 = vsel %vm166, 1, 0
    %v174 = vsel %vm167, 1, 0
    %v175 = vsel %vm168, 1, 0
    %v176 = vsel %vm169, 1, 0
    %v177 = vcvt.s32.f32 %v170
    %v178 = vcvt.s32.f32 %v171
    %v179 = vcvt.s32.f32 %v172
    %v180 = vcvt.s32.f32 %v173
    %v181 = vcvt.s32.f32 %v174
    %v182 = vcvt.s32.f32 %v175
    %v183 = vcvt.s32.f32 %v176
    %v184 = vld [vmem:[%s4] sm:$0xff]
    %v185 = vld [vmem:[%s4 + $0x8] sm:$0xff]
    %v186 = vld [vmem:[%s4 + $0x10] sm:$0x3f]
    %vm187 = vcmask 179200
    %v189 = vsel %vm187, %v177, 0
    %v192 = vsel %vm187, %v178, 0
    %v195 = vsel %vm187, %v179, 0
    %v198 = vsel %vm187, %v180, 0
    %v201 = vsel %vm187, %v181, 0
    %v204 = vsel %vm187, %v182, 0
    %v207 = vsel %vm187, %v183, 0
    %vm209 = vcmask 1045504
    %v211 = vsel %vm209, %v186, 0
    %213 = vmatprep.subr.mxu0 0.0
    %214 = vmatpush1.msra.mxu0 0.0
    %215 = vmatprep.subr.mxu0 0.0
    %216 = vmatpush1.msra.mxu0 0.0
    %217 = vmatprep.subr.mxu0 0.0
    %218 = vmatpush1.msra.mxu0 0.0
    %219 = vmatprep.subr.mxu0 0.0
    %220 = vmatpush1.msra.mxu0 0.0
    %221 = vmatprep.subr.mxu0 0.0
    %222 = vmatpush1.msra.mxu0 0.0
    %223 = vmatprep.subr.mxu0 0.0
    %224 = vmatpush1.msra.mxu0 0.0
    %225 = vmatprep.subr.mxu0 0.0
    %226 = vmatpush1.msra.mxu0 0.0
    %227 = vmatprep.subr.mxu0 0.0
    %228 = vmatpush1.msra.mxu0 0.0
    %229 = vmatprep.subr.mxu0 0.0
    %230 = vmatpush1.msra.mxu0 0.0
    %231 = vmatprep.subr.mxu0 0.0
    %232 = vmatpush1.msra.mxu0 0.0
    %233 = vmatprep.subr.mxu0 0.0
    %234 = vmatpush1.msra.mxu0 0.0
    %235 = vmatprep.subr.mxu0 0.0
    %236 = vmatpush1.msra.mxu0 0.0
    %237 = vmatprep.subr.mxu0 0.0
    %238 = vmatpush1.msra.mxu0 0.0
    %239 = vmatprep.subr.mxu0 0.0
    %240 = vmatpush1.msra.mxu0 %v211
    %241 = vmatprep.subr.mxu0 0.0
    %242 = vmatpush1.msra.mxu0 %v185
    %243 = vmatprep.subr.mxu0 0.0
    %244 = vmatpush1.msra.mxu0 %v184
    %245 = vmatprep.subr.mxu0 0.0
    %246 = vmatpush2.msra.mxu0 0.0
    %247 = vmatprep.subr.mxu0 0.0
    %248 = vmatpush2.msra.mxu0 0.0
    %249 = vmatprep.subr.mxu0 0.0
    %250 = vmatpush2.msra.mxu0 0.0
    %251 = vmatprep.subr.mxu0 0.0
    %252 = vmatpush2.msra.mxu0 0.0
    %253 = vmatprep.subr.mxu0 0.0
    %254 = vmatpush2.msra.mxu0 0.0
    %255 = vmatprep.subr.mxu0 0.0
    %256 = vmatpush2.msra.mxu0 0.0
    %257 = vmatprep.subr.mxu0 0.0
    %258 = vmatpush2.msra.mxu0 0.0
    %259 = vmatprep.subr.mxu0 0.0
    %260 = vmatpush2.msra.mxu0 0.0
    %261 = vmatprep.subr.mxu0 0.0
    %262 = vmatpush2.msra.mxu0 0.0
    %263 = vmatprep.subr.mxu0 0.0
    %264 = vmatpush2.msra.mxu0 0.0
    %265 = vmatprep.subr.mxu0 0.0
    %266 = vmatpush2.msra.mxu0 0.0
    %267 = vmatprep.subr.mxu0 0.0
    %268 = vmatpush2.msra.mxu0 0.0
    %269 = vmatprep.subr.mxu0 0.0
    %270 = vmatpush2.msra.mxu0 0.0
    %271 = vmatprep.subr.mxu0 0.0
    %272 = vmatpush2.msra.mxu0 0.0
    %273 = vmatprep.subr.mxu0 0.0
    %274 = vmatpush2.msra.mxu0 0.0
    %275 = vmatprep.subr.mxu0 0.0
    %276 = vmatpush2.msra.mxu0 0.0
    %277 = vmatprep.mubr.f32.mxu0 0.0
    %278 = vmatmul.mubr.f32.gmra.mxu0 %v189
    %v279 = vpop.f32.mrf.mxu0
    %v280 = vadd.f32 0.0, %v279
    %v281 = vpop.f32.mrf.mxu0
    %282 = vmatprep.mubr.f32.mxu0 0.0
    %283 = vmatmul.mubr.f32.gmra.mxu0 %v192
    %v284 = vpop.f32.mrf.mxu0
    %v285 = vadd.f32 0.0, %v284
    %v286 = vpop.f32.mrf.mxu0
    %287 = vmatprep.mubr.f32.mxu0 0.0
    %288 = vmatmul.mubr.f32.gmra.mxu0 %v195
    %v289 = vpop.f32.mrf.mxu0
    %v290 = vadd.f32 0.0, %v289
    %v291 = vpop.f32.mrf.mxu0
    %292 = vmatprep.mubr.f32.mxu0 0.0
    %293 = vmatmul.mubr.f32.gmra.mxu0 %v198
    %v294 = vpop.f32.mrf.mxu0
    %v295 = vadd.f32 0.0, %v294
    %v296 = vpop.f32.mrf.mxu0
    %297 = vmatprep.mubr.f32.mxu0 0.0
    %298 = vmatmul.mubr.f32.gmra.mxu0 %v201
    %v299 = vpop.f32.mrf.mxu0
    %v300 = vadd.f32 0.0, %v299
    %v301 = vpop.f32.mrf.mxu0
    %302 = vmatprep.mubr.f32.mxu0 0.0
    %303 = vmatmul.mubr.f32.gmra.mxu0 %v204
    %v304 = vpop.f32.mrf.mxu0
    %v305 = vadd.f32 0.0, %v304
    %v306 = vpop.f32.mrf.mxu0
    %307 = vmatprep.mubr.f32.mxu0 0.0
    %308 = vmatmul.mubr.f32.gmra.mxu0 %v207
    %v309 = vpop.f32.mrf.mxu0
    %v310 = vadd.f32 0.0, %v309
    %v311 = vpop.f32.mrf.mxu0
    %312 = vdwg.mxu0
    %320 = vrot.lane.b32.xlu0 %v280, 32
    %v321 = vpop.permute.xlu0 %320
    %322 = vrot.lane.b32.xlu0 %v285, 32
    %v323 = vpop.permute.xlu0 %322
    %324 = vrot.lane.b32.xlu0 %v290, 32
    %v325 = vpop.permute.xlu0 %324
    %326 = vrot.lane.b32.xlu0 %v295, 32
    %v327 = vpop.permute.xlu0 %326
    %328 = vrot.lane.b32.xlu0 %v300, 32
    %v329 = vpop.permute.xlu0 %328
    %330 = vrot.lane.b32.xlu0 %v305, 32
    %v331 = vpop.permute.xlu0 %330
    %332 = vrot.lane.b32.xlu0 %v310, 32
    %v333 = vpop.permute.xlu0 %332
    %v341 = vsel %vm56, %v104, %v321
    %v342 = vsel %vm56, %v107, %v323
    %v343 = vsel %vm56, %v112, %v325
    %v344 = vsel %vm56, %v115, %v327
    %v345 = vsel %vm56, %v120, %v329
    %v346 = vsel %vm56, %v123, %v331
    %v347 = vsel %vm56, %v128, %v333
    %vm348 = vcmask 523264
    %349 = vst.msk [vmem:[#allocation2] sm:$0xff] %vm348, %v341
    %350 = vst.msk [vmem:[#allocation2 + $0x8] sm:$0xff] %vm348, %v342
    %351 = vst.msk [vmem:[#allocation2 + $0x10] sm:$0xff] %vm348, %v343
    %352 = vst.msk [vmem:[#allocation2 + $0x18] sm:$0xff] %vm348, %v344
    %353 = vst.msk [vmem:[#allocation2 + $0x20] sm:$0xff] %vm348, %v345
    %354 = vst.msk [vmem:[#allocation2 + $0x28] sm:$0xff] %vm348, %v346
    %355 = vst.msk [vmem:[#allocation2 + $0x30] sm:$0xff] %vm348, %v347
    // Predicated region
    $region22: #{tpu_custom_call.1} parent=1 // pred_check
      _
    $region23: #{tpu_custom_call.1} parent=1 // pred_check_branch
      %357 = sbr.rel (0) target = $region25
    $region24: #{tpu_custom_call.1} parent=1 // pred_region
      %s359 = ssub.s32 896, 896
      %360 = vsyncadd [#allocation3], %s359
      %s361 = sshll.u32 [#allocation2], 4
      %s362 = int_to_ptr.vmem [resolvable:$true] %s361
      %367 = dma.vmem_to_hbm [thread:$0]  %s362, 896, %s5, [#allocation3], 128, 128, 8
    $region25: #{tpu_custom_call.1} parent=1 // pred_fallthru
      _
    // Predicated region
    $region26: #{tpu_custom_call.1} parent=1 // pred_check
      _
    $region27: #{tpu_custom_call.1} parent=1 // pred_check_branch
      %369 = sbr.rel (0) target = $region29
    $region28: #{tpu_custom_call.1} parent=1 // pred_region
      %370 = dma.done [#allocation3], 896
    $region29: #{tpu_custom_call.1} parent=1 // pred_fallthru
      _
    %371 = vsyncpa [#allocation3], 1

</llo_original>
